<compile_context>
chip_gen: v7x
topology: tpu7x:2x2x1
jax: 0.10.0
libtpu: 0.0.40
codegen_flags: <defaults>
</compile_context>

<pallas_src>
import functools

import jax
import jax.numpy as jnp
from jax import lax
from jax.experimental import pallas as pl
from jax.experimental.pallas import tpu as pltpu

C_IN = 4            # input channels (split(3, dim=-3)[0] -> channels 0:3)
C_RES = 3           # residual / output channels
HIDDEN = 32         # encoder hidden channels

G = 8               # spatial groups packed on sublanes: 8*4=32 in, 8*3=24 out rows
LANE_CHUNK = 2048   # inner compute chunk (bounds the (256, chunk) hidden to ~2 MiB)
MAX_TILE_LANES = 32768   # max lanes streamed per grid step


def _round_up(x, m):
    return ((x + m - 1) // m) * m


def _choose_tiling(hw, n):
    """Return (tile, n_tiles, chunk): lanes per grid step, steps per image, inner chunk."""
    # Minimal per-group packed length, lane aligned.
    s0 = _round_up(pl.cdiv(hw, G), 128)
    n_tiles = pl.cdiv(s0, MAX_TILE_LANES)
    # v7x has 2 TensorCores: make sure the 'parallel' grid has >= 2 blocks
    # even for a single image (when the image is big enough to be worth it).
    if n == 1 and s0 >= 2 * LANE_CHUNK:
        n_tiles = max(n_tiles, 2)
    tile0 = _round_up(pl.cdiv(s0, n_tiles), 128)
    # Pick an inner chunk that divides the tile exactly (no remainder handling,
    # tiny lane-padding waste: < 128 lanes per chunk).
    n_chunks = pl.cdiv(tile0, LANE_CHUNK)
    chunk = _round_up(pl.cdiv(tile0, n_chunks), 128)
    tile = chunk * n_chunks
    return tile, n_tiles, chunk


def _ef_kernel(x_ref, w1_ref, b1_ref, w2_ref, b2_ref, o_ref, *, chunk, n_chunks):
    # x_ref : (G*C_IN,   tile)    packed input, row = c*G + g, spatial on lanes
    # w1_ref: (G*HIDDEN, G*C_IN)  block-diagonal encoder weight  (kron(W1^T, I_G))
    # b1_ref: (G*HIDDEN, 1)
    # w2_ref: (G*C_RES,  G*HIDDEN) block-diagonal forecaster weight (kron(W2^T, I_G))
    # b2_ref: (G*C_RES,  1)
    # o_ref : (G*C_RES,  tile)    packed output, row = o*G + g (lane-dense stores)
    w1 = w1_ref[...]
    b1 = b1_ref[...]
    w2 = w2_ref[...]
    b2 = b2_ref[...]

    def compute(start):
        x = x_ref[:, pl.ds(start, chunk)]                       # (32, chunk)
        # encoder: pointwise conv + ReLU (MXU, f32 accumulation)
        h = jnp.dot(w1, x, preferred_element_type=jnp.float32) + b1   # (256, chunk)
        h = jnp.maximum(h, 0.0)
        # forecaster: pointwise conv
        y = jnp.dot(w2, h, preferred_element_type=jnp.float32) + b2   # (24, chunk)
        # residual = input channels 0:3.  Channel-major packing makes this the
        # first 24 sublane rows of x (vreg-aligned slice, no gather).
        y = y + x[: G * C_RES, :]
        o_ref[:, pl.ds(start, chunk)] = y.astype(o_ref.dtype)

    if n_chunks == 1:
        compute(0)
    else:
        # fori_loop (not an unrolled Python loop) bounds the live range of the
        # (256, chunk) hidden so peak VMEM is one chunk, not n_chunks chunks.
        def body(i, carry):
            compute(pl.multiple_of(i * chunk, chunk))
            return carry

        lax.fori_loop(0, n_chunks, body, 0)


def ef_forward(x_nchw, w1, b1, w2, b2):
    """x_nchw: (N, C_IN, H, W) f32; w1:(C_IN,HIDDEN) b1:(1,HIDDEN)
    w2:(HIDDEN,C_RES) b2:(1,C_RES)  ->  (N, C_RES, H, W) f32."""
    n, c, h, w = x_nchw.shape
    assert c == C_IN
    hw = h * w

    tile, n_tiles, chunk = _choose_tiling(hw, n)
    s_im = tile * n_tiles          # packed per-group length per image
    hw_pad = G * s_im

    # Single relayout: (N, C, H, W) -> (N, G*C_IN, s_im), channel-major rows
    # (row r = c*G + g holds the g-th spatial chunk of channel c).  This is a
    # pure row-major reshape; padding is only needed when hw % (G*128) != 0.
    if hw_pad == hw:
        xp = x_nchw.reshape(n, G * C_IN, s_im)
    else:
        xf = x_nchw.reshape(n, C_IN, hw)
        xf = jnp.pad(xf, ((0, 0), (0, 0), (0, hw_pad - hw)))
        xp = xf.reshape(n, G * C_IN, s_im)

    # Tiny packed (block-diagonal) weights / biases, resident in VMEM.
    eye_g = jnp.eye(G, dtype=jnp.float32)
    w1p = jnp.kron(jnp.transpose(w1), eye_g)       # (G*HIDDEN, G*C_IN)  = (256, 32)
    w2p = jnp.kron(jnp.transpose(w2), eye_g)       # (G*C_RES,  G*HIDDEN)= (24, 256)
    b1p = jnp.repeat(b1[0], G)[:, None]            # (G*HIDDEN, 1)
    b2p = jnp.repeat(b2[0], G)[:, None]            # (G*C_RES, 1)

    n_chunks = tile // chunk
    kernel = functools.partial(_ef_kernel, chunk=chunk, n_chunks=n_chunks)

    grid = (n, n_tiles)
    # Truthful traffic: sublanes are dense, so streamed bytes = 4*(32+24)*n*s_im.
    bytes_accessed = 4 * n * s_im * (G * C_IN + G * C_RES)
    flops = 2 * (G * HIDDEN * G * C_IN + G * C_RES * G * HIDDEN) * n * s_im

    out = pl.pallas_call(
        kernel,
        out_shape=jax.ShapeDtypeStruct((n, G * C_RES, s_im), jnp.float32),
        grid=grid,
        in_specs=[
            pl.BlockSpec((None, G * C_IN, tile), lambda i, j: (i, 0, j)),
            pl.BlockSpec((G * HIDDEN, G * C_IN), lambda i, j: (0, 0)),
            pl.BlockSpec((G * HIDDEN, 1), lambda i, j: (0, 0)),
            pl.BlockSpec((G * C_RES, G * HIDDEN), lambda i, j: (0, 0)),
            pl.BlockSpec((G * C_RES, 1), lambda i, j: (0, 0)),
        ],
        out_specs=pl.BlockSpec((None, G * C_RES, tile), lambda i, j: (i, 0, j)),
        compiler_params=pltpu.CompilerParams(
            dimension_semantics=("parallel", "parallel"),
            vmem_limit_bytes=32 * 1024 * 1024,
        ),
        cost_estimate=pl.CostEstimate(
            flops=flops, transcendentals=0, bytes_accessed=bytes_accessed
        ),
    )(xp, w1p, b1p, w2p, b2p)

    # Inverse packing: (N, G*C_RES, s_im) -> (N, C_RES, H, W).  Pure reshape
    # (plus a tail slice when padding was needed).
    if hw_pad == hw:
        return out.reshape(n, C_RES, h, w)
    return out.reshape(n, C_RES, hw_pad)[:, :, :hw].reshape(n, C_RES, h, w)


def ef_reference(x_nchw, w1, b1, w2, b2):
    """Pure-JAX reference mirroring the PyTorch semantics."""
    x_rows = jnp.transpose(x_nchw, (0, 2, 3, 1))  # NHWC
    h = jnp.maximum(x_rows @ w1 + b1[0], 0.0)
    y = h @ w2 + b2[0]
    y = y + x_rows[..., :C_RES]
    return jnp.transpose(y, (0, 3, 1, 2))


if __name__ == "__main__":
    key = jax.random.PRNGKey(0)
    k_x, k_w1, k_b1, k_w2, k_b2 = jax.random.split(key, 5)

    # Small shapes consistent with the forward pass: NCHW, C_IN=4 so that
    # split(3, dim=-3)[0] picks the first 3 channels.
    x = jax.random.normal(k_x, (2, C_IN, 16, 16), dtype=jnp.float32)

    w1 = jax.random.normal(k_w1, (C_IN, HIDDEN), dtype=jnp.float32) * 0.1
    b1 = jax.random.normal(k_b1, (1, HIDDEN), dtype=jnp.float32) * 0.1
    w2 = jax.random.normal(k_w2, (HIDDEN, C_RES), dtype=jnp.float32) * 0.1
    b2 = jax.random.normal(k_b2, (1, C_RES), dtype=jnp.float32) * 0.1

    ef = jax.jit(ef_forward)

    out = jax.block_until_ready(ef(x, w1, b1, w2, b2))
    ref = jax.block_until_ready(ef_reference(x, w1, b1, w2, b2))
    assert out.shape == (2, C_RES, 16, 16), out.shape
    assert jnp.max(jnp.abs(out - ref)) < 1e-4

    # Pad-free fast path (H*W multiple of G*128) with a single image
    # (exercises the n==1 tiling branch).
    x1 = jax.random.normal(k_x, (1, C_IN, 32, 32), dtype=jnp.float32)
    out1 = jax.block_until_ready(ef(x1, w1, b1, w2, b2))
    ref1 = jax.block_until_ready(ef_reference(x1, w1, b1, w2, b2))
    assert out1.shape == (1, C_RES, 32, 32), out1.shape
    assert jnp.max(jnp.abs(out1 - ref1)) < 1e-4

    # Awkward spatial size (wrapper pad + unpad path).
    x_odd = jax.random.normal(k_x, (2, C_IN, 5, 7), dtype=jnp.float32)
    out_odd = jax.block_until_ready(ef(x_odd, w1, b1, w2, b2))
    ref_odd = jax.block_until_ready(ef_reference(x_odd, w1, b1, w2, b2))
    assert out_odd.shape == (2, C_RES, 5, 7), out_odd.shape
    assert jnp.max(jnp.abs(out_odd - ref_odd)) < 1e-4

    # Larger spatial size that triggers the in-kernel lane-chunk fori_loop
    # (dynamic-offset loads/stores path).
    x_big = jax.random.normal(k_x, (2, C_IN, 160, 160), dtype=jnp.float32)
    out_big = jax.block_until_ready(ef(x_big, w1, b1, w2, b2))
    ref_big = jax.block_until_ready(ef_reference(x_big, w1, b1, w2, b2))
    assert out_big.shape == (2, C_RES, 160, 160), out_big.shape
    assert jnp.max(jnp.abs(out_big - ref_big)) < 1e-4

    print("KERNEL_OK")
</pallas_src>

<mosaic_0001>
module attributes {stable_mosaic.version = 11 : i64} {
  func.func @_ef_kernel(%arg0: i32, %arg1: i32, %arg2: memref<1x32x128xf32, #tpu.memory_space<vmem>>, %arg3: memref<256x32xf32, #tpu.memory_space<vmem>>, %arg4: memref<256x1xf32, #tpu.memory_space<vmem>>, %arg5: memref<24x256xf32, #tpu.memory_space<vmem>>, %arg6: memref<24x1xf32, #tpu.memory_space<vmem>>, %arg7: memref<1x24x128xf32, #tpu.memory_space<vmem>>) attributes {dimension_semantics = [#tpu.dimension_semantics<parallel>, #tpu.dimension_semantics<parallel>], iteration_bounds = array<i64: 2, 1>, scalar_prefetch = 0 : i64, scratch_operands = 0 : i64, tpu.core_type = #tpu.core_type<tc>, window_params = [{transform_indices = @transform_0, window_bounds = array<i64: 1, 32, 128>}, {pipeline_mode = #tpu.pipeline_mode<synchronous>, transform_indices = @transform_1, window_bounds = array<i64: 256, 32>}, {pipeline_mode = #tpu.pipeline_mode<synchronous>, transform_indices = @transform_2, window_bounds = array<i64: 256, 1>}, {pipeline_mode = #tpu.pipeline_mode<synchronous>, transform_indices = @transform_3, window_bounds = array<i64: 24, 256>}, {pipeline_mode = #tpu.pipeline_mode<synchronous>, transform_indices = @transform_4, window_bounds = array<i64: 24, 1>}, {transform_indices = @transform_5, window_bounds = array<i64: 1, 24, 128>}]} {
    %c0 = arith.constant 0 : index
    %c0_0 = arith.constant 0 : index
    %0 = vector.load %arg3[%c0, %c0_0] : memref<256x32xf32, #tpu.memory_space<vmem>>, vector<256x32xf32>
    %c0_1 = arith.constant 0 : index
    %c0_2 = arith.constant 0 : index
    %1 = vector.load %arg4[%c0_1, %c0_2] : memref<256x1xf32, #tpu.memory_space<vmem>>, vector<256x1xf32>
    %c0_3 = arith.constant 0 : index
    %c0_4 = arith.constant 0 : index
    %2 = vector.load %arg5[%c0_3, %c0_4] : memref<24x256xf32, #tpu.memory_space<vmem>>, vector<24x256xf32>
    %c0_5 = arith.constant 0 : index
    %c0_6 = arith.constant 0 : index
    %3 = vector.load %arg6[%c0_5, %c0_6] : memref<24x1xf32, #tpu.memory_space<vmem>>, vector<24x1xf32>
    %c0_7 = arith.constant 0 : index
    %c0_8 = arith.constant 0 : index
    %c0_9 = arith.constant 0 : index
    %4 = vector.load %arg2[%c0_7, %c0_8, %c0_9] : memref<1x32x128xf32, #tpu.memory_space<vmem>>, vector<1x32x128xf32>
    %5 = vector.shape_cast %4 : vector<1x32x128xf32> to vector<32x128xf32>
    %cst = arith.constant dense<0.000000e+00> : vector<256x128xf32>
    %6 = tpu.matmul %0, %5, %cst {dimension_numbers = #tpu.dot_dimension_numbers<[1], [0], [0], [1], [0, 0, 1, 1], [], []>} : vector<256x32xf32>, vector<32x128xf32>, vector<256x128xf32> -> vector<256x128xf32>
    %7 = vector.broadcast %1 : vector<256x1xf32> to vector<256x128xf32>
    %8 = arith.addf %6, %7 : vector<256x128xf32>
    %cst_10 = arith.constant 0.000000e+00 : f32
    %9 = vector.broadcast %cst_10 : f32 to vector<256x128xf32>
    %10 = arith.maximumf %8, %9 : vector<256x128xf32>
    %cst_11 = arith.constant dense<0.000000e+00> : vector<24x128xf32>
    %11 = tpu.matmul %2, %10, %cst_11 {dimension_numbers = #tpu.dot_dimension_numbers<[1], [0], [0], [1], [0, 0, 1, 1], [], []>} : vector<24x256xf32>, vector<256x128xf32>, vector<24x128xf32> -> vector<24x128xf32>
    %12 = vector.broadcast %3 : vector<24x1xf32> to vector<24x128xf32>
    %13 = arith.addf %11, %12 : vector<24x128xf32>
    %14 = vector.extract_strided_slice %5 {offsets = [0, 0], sizes = [24, 128], strides = [1, 1]} : vector<32x128xf32> to vector<24x128xf32>
    %15 = arith.addf %13, %14 : vector<24x128xf32>
    %c0_12 = arith.constant 0 : index
    %c0_13 = arith.constant 0 : index
    %c0_14 = arith.constant 0 : index
    %16 = vector.load %arg7[%c0_12, %c0_13, %c0_14] : memref<1x24x128xf32, #tpu.memory_space<vmem>>, vector<1x24x128xf32>
    %17 = vector.shape_cast %16 : vector<1x24x128xf32> to vector<24x128xf32>
    %18 = vector.shape_cast %15 : vector<24x128xf32> to vector<1x24x128xf32>
    tpu.vector_store %arg7[%c0_12, %c0_13, %c0_14], %18 {strides = array<i32>} : memref<1x24x128xf32, #tpu.memory_space<vmem>>, vector<1x24x128xf32>,
    return
  }
  func.func @transform_0(%arg0: i32, %arg1: i32) -> (i32, i32, i32) {
    %c0_i32 = arith.constant 0 : i32
    %c0_i32_0 = arith.constant 0 : i32
    return %arg0, %c0_i32, %arg1 : i32, i32, i32
  }
  func.func @transform_1(%arg0: i32, %arg1: i32) -> (i32, i32) {
    %c0_i32 = arith.constant 0 : i32
    %c0_i32_0 = arith.constant 0 : i32
    %c0_i32_1 = arith.constant 0 : i32
    return %c0_i32, %c0_i32_0 : i32, i32
  }
  func.func @transform_2(%arg0: i32, %arg1: i32) -> (i32, i32) {
    %c0_i32 = arith.constant 0 : i32
    %c0_i32_0 = arith.constant 0 : i32
    %c0_i32_1 = arith.constant 0 : i32
    return %c0_i32, %c0_i32_0 : i32, i32
  }
  func.func @transform_3(%arg0: i32, %arg1: i32) -> (i32, i32) {
    %c0_i32 = arith.constant 0 : i32
    %c0_i32_0 = arith.constant 0 : i32
    %c0_i32_1 = arith.constant 0 : i32
    return %c0_i32, %c0_i32_0 : i32, i32
  }
  func.func @transform_4(%arg0: i32, %arg1: i32) -> (i32, i32) {
    %c0_i32 = arith.constant 0 : i32
    %c0_i32_0 = arith.constant 0 : i32
    %c0_i32_1 = arith.constant 0 : i32
    return %c0_i32, %c0_i32_0 : i32, i32
  }
  func.func @transform_5(%arg0: i32, %arg1: i32) -> (i32, i32, i32) {
    %c0_i32 = arith.constant 0 : i32
    %c0_i32_0 = arith.constant 0 : i32
    return %arg0, %c0_i32, %arg1 : i32, i32, i32
  }
}

</mosaic_0001>

<llo_original>
// kernel: ef_forward.1
$region0: #{ef_forward.1}
  #allocation0 [shape = 'u32[]', space=smem, size = 0x4, offset = 0x4, fixed_abs, tag = 'smem constant byte address 0x4 - core index']
  #allocation1 [shape = 'u32[144,128]{1,0:T(1,128)}', space=vmem, size = 0x12000, scoped, tag = 'internal scratch']
  %s0 = inlined_call_operand.vmem [shape: f32[2,32,128], index: 0, kind: input, shape index: {}]
  %s1 = inlined_call_operand.vmem [shape: f32[256,32], index: 1, kind: input, shape index: {}]
  %s2 = inlined_call_operand.vmem [shape: f32[256,1], index: 2, kind: input, shape index: {}]
  %s3 = inlined_call_operand.vmem [shape: f32[24,256], index: 3, kind: input, shape index: {}]
  %s4 = inlined_call_operand.vmem [shape: f32[24,1], index: 4, kind: input, shape index: {}]
  %s5 = inlined_call_operand.vmem [shape: f32[2,24,128], index: 5, kind: output, shape index: {}]
  %s6 = sld [smem:[#allocation0]]
  $region53: #{ef_forward.1} parent=0
    _
  %s8 = ssub.s32 1, %s6
  %s9 = scalar_select 0, %s8, %s6
  loop: start=0, step=1, limit=4
  $region2: #{ef_forward.1} parent=0 // loop_pre_header
    _
  $region3: #{ef_forward.1} parent=0 // loop_header
    %s11 = sphi 0, %s15
    %p12 = scmp.ge.s32.totalorder %s11, 4
    %s18 = sphi 0, %s30
    %s19 = sphi 0, %s26
    %s20 = sphi 0, %s18
    %s21 = sphi 0, %s19
    %s22 = sphi 0, %s20
    %s23 = sphi 0, %s21
    %s35 = sphi 0, %s37
    %s38 = sphi 0, %s35
    %s39 = sphi 0, %s38
    %s55 = sphi 0, %s39
    %s59 = sphi 0, %s59
    %s61 = sphi 0, %s59
    %s62 = sphi 0, %s61
    %s76 = sphi 0, %s62
    %s80 = sphi 0, %s80
    %s82 = sphi 0, %s80
    %s83 = sphi 0, %s82
    %s97 = sphi 0, %s83
    %s101 = sphi 0, %s101
    %s103 = sphi 0, %s101
    %s104 = sphi 0, %s103
    %s118 = sphi 0, %s104
    %s122 = sphi 0, %s122
    %s124 = sphi 0, %s122
    %s125 = sphi 0, %s124
    %s139 = sphi 0, %s125
    %s147 = sphi 0, %s149
    %s150 = sphi 0, %s147
    %s151 = sphi 0, %s150
    %s167 = sphi 0, %s151
  $region4: #{ef_forward.1} parent=0 // loop_header_branch
    %14 = sbr.rel (%p12) target = $region8
  $region5: #{ef_forward.1} parent=0 // loop_body
    %s16 = ssub.s32 %s11, 1
    %s17 = ssub.s32 %s11, 2
    %s24 = sadd.s32 1, %s19
    %p25 = scmp.ge.s32.totalorder %s24, 1
    %s26 = scalar_select %p25, 0, %s24
    %s27 = sadd.s32 1, %s18
    %s28 = scalar_select %p25, %s27, %s18
    %p29 = scmp.ge.s32.totalorder %s28, 2
    %s30 = scalar_select %p29, 0, %s28
    %s31 = ssub.s32 %s18, %s30
    %s32 = ssub.s32 %s19, %s26
    %s33 = sor.u32 %s31, %s32
    %p34 = scmp.eq.s32.totalorder %s33, 0
    %s36 = sadd.s32 %s35, 1
    %s37 = scalar_select %p34, %s35, %s36
    %p40 = pneg %p34
    %p41 = scmp.eq.s32.totalorder %s11, 1
    %p42 = por %p40, %p41
    %p43 = scmp.ne.s32.totalorder %s35, %s38
    %p44 = scmp.eq.s32.totalorder %s11, 0
    %p45 = por %p43, %p44
    %p46 = scmp.ne.s32.totalorder %s35, %s38
    %p47 = scmp.eq.s32.totalorder %s16, 1
    %p48 = por %p46, %p47
    %p49 = scmp.ne.s32.totalorder %s38, %s39
    %p50 = scmp.eq.s32.totalorder %s16, 0
    %p51 = por %p49, %p50
    %p52 = scmp.ne.s32.totalorder %s38, %s39
    %p53 = scmp.eq.s32.totalorder %s17, 1
    %p54 = por %p52, %p53
    %p56 = scmp.ne.s32.totalorder %s39, %s55
    %p57 = scmp.eq.s32.totalorder %s17, 0
    %p58 = por %p56, %p57
    %s60 = sadd.s32 %s59, 1
    %p63 = scmp.eq.s32.totalorder %s11, 1
    %p64 = scmp.ne.s32.totalorder %s59, %s61
    %p65 = scmp.eq.s32.totalorder %s11, 0
    %p66 = por %p64, %p65
    %p67 = scmp.ne.s32.totalorder %s59, %s61
    %p68 = scmp.eq.s32.totalorder %s16, 1
    %p69 = por %p67, %p68
    %p70 = scmp.ne.s32.totalorder %s61, %s62
    %p71 = scmp.eq.s32.totalorder %s16, 0
    %p72 = por %p70, %p71
    %p73 = scmp.ne.s32.totalorder %s61, %s62
    %p74 = scmp.eq.s32.totalorder %s17, 1
    %p75 = por %p73, %p74
    %p77 = scmp.ne.s32.totalorder %s62, %s76
    %p78 = scmp.eq.s32.totalorder %s17, 0
    %p79 = por %p77, %p78
    %s81 = sadd.s32 %s80, 1
    %p84 = scmp.eq.s32.totalorder %s11, 1
    %p85 = scmp.ne.s32.totalorder %s80, %s82
    %p86 = scmp.eq.s32.totalorder %s11, 0
    %p87 = por %p85, %p86
    %p88 = scmp.ne.s32.totalorder %s80, %s82
    %p89 = scmp.eq.s32.totalorder %s16, 1
    %p90 = por %p88, %p89
    %p91 = scmp.ne.s32.totalorder %s82, %s83
    %p92 = scmp.eq.s32.totalorder %s16, 0
    %p93 = por %p91, %p92
    %p94 = scmp.ne.s32.totalorder %s82, %s83
    %p95 = scmp.eq.s32.totalorder %s17, 1
    %p96 = por %p94, %p95
    %p98 = scmp.ne.s32.totalorder %s83, %s97
    %p99 = scmp.eq.s32.totalorder %s17, 0
    %p100 = por %p98, %p99
    %s102 = sadd.s32 %s101, 1
    %p105 = scmp.eq.s32.totalorder %s11, 1
    %p106 = scmp.ne.s32.totalorder %s101, %s103
    %p107 = scmp.eq.s32.totalorder %s11, 0
    %p108 = por %p106, %p107
    %p109 = scmp.ne.s32.totalorder %s101, %s103
    %p110 = scmp.eq.s32.totalorder %s16, 1
    %p111 = por %p109, %p110
    %p112 = scmp.ne.s32.totalorder %s103, %s104
    %p113 = scmp.eq.s32.totalorder %s16, 0
    %p114 = por %p112, %p113
    %p115 = scmp.ne.s32.totalorder %s103, %s104
    %p116 = scmp.eq.s32.totalorder %s17, 1
    %p117 = por %p115, %p116
    %p119 = scmp.ne.s32.totalorder %s104, %s118
    %p120 = scmp.eq.s32.totalorder %s17, 0
    %p121 = por %p119, %p120
    %s123 = sadd.s32 %s122, 1
    %p126 = scmp.eq.s32.totalorder %s11, 1
    %p127 = scmp.ne.s32.totalorder %s122, %s124
    %p128 = scmp.eq.s32.totalorder %s11, 0
    %p129 = por %p127, %p128
    %p130 = scmp.ne.s32.totalorder %s122, %s124
    %p131 = scmp.eq.s32.totalorder %s16, 1
    %p132 = por %p130, %p131
    %p133 = scmp.ne.s32.totalorder %s124, %s125
    %p134 = scmp.eq.s32.totalorder %s16, 0
    %p135 = por %p133, %p134
    %p136 = scmp.ne.s32.totalorder %s124, %s125
    %p137 = scmp.eq.s32.totalorder %s17, 1
    %p138 = por %p136, %p137
    %p140 = scmp.ne.s32.totalorder %s125, %s139
    %p141 = scmp.eq.s32.totalorder %s17, 0
    %p142 = por %p140, %p141
    %s143 = ssub.s32 %s18, %s30
    %s144 = ssub.s32 %s19, %s26
    %s145 = sor.u32 %s143, %s144
    %p146 = scmp.eq.s32.totalorder %s145, 0
    %s148 = sadd.s32 %s147, 1
    %s149 = scalar_select %p146, %s147, %s148
    %p152 = pneg %p146
    %p153 = scmp.eq.s32.totalorder %s11, 1
    %p154 = por %p152, %p153
    %p155 = scmp.ne.s32.totalorder %s147, %s150
    %p156 = scmp.eq.s32.totalorder %s11, 0
    %p157 = por %p155, %p156
    %p158 = scmp.ne.s32.totalorder %s147, %s150
    %p159 = scmp.eq.s32.totalorder %s16, 1
    %p160 = por %p158, %p159
    %p161 = scmp.ne.s32.totalorder %s150, %s151
    %p162 = scmp.eq.s32.totalorder %s16, 0
    %p163 = por %p161, %p162
    %p164 = scmp.ne.s32.totalorder %s150, %s151
    %p165 = scmp.eq.s32.totalorder %s17, 1
    %p166 = por %p164, %p165
    %p168 = scmp.ne.s32.totalorder %s151, %s167
    %p169 = scmp.eq.s32.totalorder %s17, 0
    %p170 = por %p168, %p169
    %p171 = scmp.le.s32.totalorder 1, %s11
    %p172 = scmp.lt.s32.totalorder %s11, 3
    %p173 = pnand %p171, %p172
    %p174 = pneg %p173
    // Predicated region
    $region9: #{ef_forward.1} parent=5 // pred_check
      _
    $region10: #{ef_forward.1} parent=5 // pred_check_branch
      %176 = sbr.rel (%p173) target = $region12
    $region11: #{ef_forward.1} parent=5 // pred_region
      %s177 = ssub.s32 %s11, 1
      // Predicated region
      $region13: #{ef_forward.1} parent=11 // pred_check
        %p178 = pneg %p72
      $region14: #{ef_forward.1} parent=11 // pred_check_branch
        %180 = sbr.rel (%p178) target = $region16
      $region15: #{ef_forward.1} parent=11 // pred_region
        _
      $region16: #{ef_forward.1} parent=11 // pred_fallthru
        _
      // Predicated region
      $region17: #{ef_forward.1} parent=11 // pred_check
        %p181 = pneg %p93
      $region18: #{ef_forward.1} parent=11 // pred_check_branch
        %183 = sbr.rel (%p181) target = $region20
      $region19: #{ef_forward.1} parent=11 // pred_region
        _
      $region20: #{ef_forward.1} parent=11 // pred_fallthru
        _
      // Predicated region
      $region21: #{ef_forward.1} parent=11 // pred_check
        %p184 = pneg %p114
      $region22: #{ef_forward.1} parent=11 // pred_check_branch
        %186 = sbr.rel (%p184) target = $region24
      $region23: #{ef_forward.1} parent=11 // pred_region
        _
      $region24: #{ef_forward.1} parent=11 // pred_fallthru
        _
      // Predicated region
      $region25: #{ef_forward.1} parent=11 // pred_check
        %p187 = pneg %p135
      $region26: #{ef_forward.1} parent=11 // pred_check_branch
        %189 = sbr.rel (%p187) target = $region28
      $region27: #{ef_forward.1} parent=11 // pred_region
        _
      $region28: #{ef_forward.1} parent=11 // pred_fallthru
        _
    $region12: #{ef_forward.1} parent=5 // pred_fallthru
      _
    %p190 = scmp.lt.s32.totalorder %s11, 2
    // Predicated region
    $region29: #{ef_forward.1} parent=5 // pred_check
      %p191 = pneg %p190
    $region30: #{ef_forward.1} parent=5 // pred_check_branch
      %193 = sbr.rel (%p191) target = $region32
    $region31: #{ef_forward.1} parent=5 // pred_region
      // Predicated region
      $region33: #{ef_forward.1} parent=31 // pred_check
        %p194 = pneg %p45
      $region34: #{ef_forward.1} parent=31 // pred_check_branch
        %196 = sbr.rel (%p194) target = $region36
      $region35: #{ef_forward.1} parent=31 // pred_region
        %p197 = scmp.lt.s32.totalorder %s18, 1
        %s198 = scalar_select %p197, %s18, 1
        %p199 = scmp.lt.s32.totalorder %s19, 0
        %s200 = scalar_select %p199, %s19, 0
        %s201 = smul.addr %s198, 4
        %s202 = sadd.s32 %s200, %s201
        %s203 = smul.addr %s202, 8
        %s204 = scalar_lea.vmem %s0, %s203
      $region36: #{ef_forward.1} parent=31 // pred_fallthru
        _
    $region32: #{ef_forward.1} parent=5 // pred_fallthru
      _
    %p205 = scmp.le.s32.totalorder 1, %s11
    %p206 = scmp.lt.s32.totalorder %s11, 3
    %p207 = pnand %p205, %p206
    %p208 = pneg %p207
    // Predicated region
    $region37: #{ef_forward.1} parent=5 // pred_check
      _
    $region38: #{ef_forward.1} parent=5 // pred_check_branch
      %210 = sbr.rel (%p207) target = $region40
    $region39: #{ef_forward.1} parent=5 // pred_region
      %s211 = ssub.s32 %s11, 1
      %p212 = scmp.lt.s32.totalorder %s20, 1
      %s213 = scalar_select %p212, %s20, 1
      %p214 = scmp.lt.s32.totalorder %s21, 0
      %s215 = scalar_select %p214, %s21, 0
      %s216 = smul.addr %s213, 4
      %s217 = sadd.s32 %s215, %s216
      %s218 = smul.addr %s217, 8
      %s219 = scalar_lea.vmem %s0, %s218
      %p220 = pneg %p51
      %p221 = pneg %p48
      %p222 = pneg %p72
      %p223 = pneg %p69
      %p224 = pneg %p93
      %p225 = pneg %p90
      %p226 = pneg %p114
      %p227 = pneg %p111
      %p228 = pneg %p135
      %p229 = pneg %p132
      %p230 = pneg %p163
      %p231 = pneg %p160
      %p232 = scmp.lt.s32.totalorder %s20, 1
      %s233 = scalar_select %p232, %s20, 1
      %p234 = scmp.lt.s32.totalorder %s21, 0
      %s235 = scalar_select %p234, %s21, 0
      %s236 = smul.addr %s233, 3
      %s237 = sadd.s32 %s235, %s236
      %s238 = smul.addr %s237, 8
      %s239 = scalar_lea.vmem %s5, %s238
      %p240 = scmp.lt.s32.totalorder %s20, 1
      %s241 = scalar_select %p240, %s20, 1
      %p242 = scmp.lt.s32.totalorder %s21, 0
      %s243 = scalar_select %p242, %s21, 0
      %s244 = smul.addr %s241, 4
      %s245 = sadd.s32 %s243, %s244
      %s246 = smul.addr %s245, 8
      %s247 = scalar_lea.vmem %s0, %s246
      %p248 = scmp.lt.s32.totalorder %s20, 1
      %s249 = scalar_select %p248, %s20, 1
      %p250 = scmp.lt.s32.totalorder %s21, 0
      %s251 = scalar_select %p250, %s21, 0
      %s252 = smul.addr %s249, 3
      %s253 = sadd.s32 %s251, %s252
      %s254 = smul.addr %s253, 8
      %s255 = scalar_lea.vmem %s5, %s254
      %v256 = vld [vmem:[%s1] sm:$0xff]
      %v257 = vld [vmem:[%s1 + $0x8] sm:$0xff]
      %v258 = vld [vmem:[%s1 + $0x10] sm:$0xff]
      %v259 = vld [vmem:[%s1 + $0x18] sm:$0xff]
      %v260 = vld [vmem:[%s1 + $0x20] sm:$0xff]
      %v261 = vld [vmem:[%s1 + $0x28] sm:$0xff]
      %v262 = vld [vmem:[%s1 + $0x30] sm:$0xff]
      %v263 = vld [vmem:[%s1 + $0x38] sm:$0xff]
      %v264 = vld [vmem:[%s1 + $0x40] sm:$0xff]
      %v265 = vld [vmem:[%s1 + $0x48] sm:$0xff]
      %v266 = vld [vmem:[%s1 + $0x50] sm:$0xff]
      %v267 = vld [vmem:[%s1 + $0x58] sm:$0xff]
      %v268 = vld [vmem:[%s1 + $0x60] sm:$0xff]
      %v269 = vld [vmem:[%s1 + $0x68] sm:$0xff]
      %v270 = vld [vmem:[%s1 + $0x70] sm:$0xff]
      %v271 = vld [vmem:[%s1 + $0x78] sm:$0xff]
      %v272 = vld [vmem:[%s1 + $0x80] sm:$0xff]
      %v273 = vld [vmem:[%s1 + $0x88] sm:$0xff]
      %v274 = vld [vmem:[%s1 + $0x90] sm:$0xff]
      %v275 = vld [vmem:[%s1 + $0x98] sm:$0xff]
      %v276 = vld [vmem:[%s1 + $0xa0] sm:$0xff]
      %v277 = vld [vmem:[%s1 + $0xa8] sm:$0xff]
      %v278 = vld [vmem:[%s1 + $0xb0] sm:$0xff]
      %v279 = vld [vmem:[%s1 + $0xb8] sm:$0xff]
      %v280 = vld [vmem:[%s1 + $0xc0] sm:$0xff]
      %v281 = vld [vmem:[%s1 + $0xc8] sm:$0xff]
      %v282 = vld [vmem:[%s1 + $0xd0] sm:$0xff]
      %v283 = vld [vmem:[%s1 + $0xd8] sm:$0xff]
      %v284 = vld [vmem:[%s1 + $0xe0] sm:$0xff]
      %v285 = vld [vmem:[%s1 + $0xe8] sm:$0xff]
      %v286 = vld [vmem:[%s1 + $0xf0] sm:$0xff]
      %v287 = vld [vmem:[%s1 + $0xf8] sm:$0xff]
      %v288 = vld [vmem:[%s2] sm:$0xff]
      %v289 = vld [vmem:[%s2 + $0x8] sm:$0xff]
      %v290 = vld [vmem:[%s2 + $0x10] sm:$0xff]
      %v291 = vld [vmem:[%s2 + $0x18] sm:$0xff]
      %v292 = vld [vmem:[%s2 + $0x20] sm:$0xff]
      %v293 = vld [vmem:[%s2 + $0x28] sm:$0xff]
      %v294 = vld [vmem:[%s2 + $0x30] sm:$0xff]
      %v295 = vld [vmem:[%s2 + $0x38] sm:$0xff]
      %v296 = vld [vmem:[%s2 + $0x40] sm:$0xff]
      %v297 = vld [vmem:[%s2 + $0x48] sm:$0xff]
      %v298 = vld [vmem:[%s2 + $0x50] sm:$0xff]
      %v299 = vld [vmem:[%s2 + $0x58] sm:$0xff]
      %v300 = vld [vmem:[%s2 + $0x60] sm:$0xff]
      %v301 = vld [vmem:[%s2 + $0x68] sm:$0xff]
      %v302 = vld [vmem:[%s2 + $0x70] sm:$0xff]
      %v303 = vld [vmem:[%s2 + $0x78] sm:$0xff]
      %v304 = vld [vmem:[%s2 + $0x80] sm:$0xff]
      %v305 = vld [vmem:[%s2 + $0x88] sm:$0xff]
      %v306 = vld [vmem:[%s2 + $0x90] sm:$0xff]
      %v307 = vld [vmem:[%s2 + $0x98] sm:$0xff]
      %v308 = vld [vmem:[%s2 + $0xa0] sm:$0xff]
      %v309 = vld [vmem:[%s2 + $0xa8] sm:$0xff]
      %v310 = vld [vmem:[%s2 + $0xb0] sm:$0xff]
      %v311 = vld [vmem:[%s2 + $0xb8] sm:$0xff]
      %v312 = vld [vmem:[%s2 + $0xc0] sm:$0xff]
      %v313 = vld [vmem:[%s2 + $0xc8] sm:$0xff]
      %v314 = vld [vmem:[%s2 + $0xd0] sm:$0xff]
      %v315 = vld [vmem:[%s2 + $0xd8] sm:$0xff]
      %v316 = vld [vmem:[%s2 + $0xe0] sm:$0xff]
      %v317 = vld [vmem:[%s2 + $0xe8] sm:$0xff]
      %v318 = vld [vmem:[%s2 + $0xf0] sm:$0xff]
      %v319 = vld [vmem:[%s2 + $0xf8] sm:$0xff]
      %v320 = vld [vmem:[%s3] sm:$0xff]
      %v321 = vld [vmem:[%s3 + $0x8] sm:$0xff]
      %v322 = vld [vmem:[%s3 + $0x10] sm:$0xff]
      %v323 = vld [vmem:[%s3 + $0x18] sm:$0xff]
      %v324 = vld [vmem:[%s3 + $0x20] sm:$0xff]
      %v325 = vld [vmem:[%s3 + $0x28] sm:$0xff]
      %v326 = vld [vmem:[%s4] sm:$0xff]
      %v327 = vld [vmem:[%s4 + $0x8] sm:$0xff]
      %v328 = vld [vmem:[%s4 + $0x10] sm:$0xff]
      %v329 = vld [vmem:[%s247] sm:$0xff]
      %v330 = vld [vmem:[%s247 + $0x8] sm:$0xff]
      %v331 = vld [vmem:[%s247 + $0x10] sm:$0xff]
      %v332 = vld [vmem:[%s247 + $0x18] sm:$0xff]
      %334 = vset.pattern.permute.xlu0 0
      %335 = vperm.xlu0 %334, %v288
      %v336 = vpop.permute.xlu0 %335
      %339 = vset.pattern.permute.xlu0 0
      %340 = vperm.xlu0 %339, %v289
      %v341 = vpop.permute.xlu0 %340
      %344 = vset.pattern.permute.xlu0 0
      %345 = vperm.xlu0 %344, %v290
      %v346 = vpop.permute.xlu0 %345
      %349 = vset.pattern.permute.xlu0 0
      %350 = vperm.xlu0 %349, %v291
      %v351 = vpop.permute.xlu0 %350
      %354 = vset.pattern.permute.xlu0 0
      %355 = vperm.xlu0 %354, %v292
      %v356 = vpop.permute.xlu0 %355
      %359 = vset.pattern.permute.xlu0 0
      %360 = vperm.xlu0 %359, %v293
      %v361 = vpop.permute.xlu0 %360
      %364 = vset.pattern.permute.xlu0 0
      %365 = vperm.xlu0 %364, %v294
      %v366 = vpop.permute.xlu0 %365
      %369 = vset.pattern.permute.xlu0 0
      %370 = vperm.xlu0 %369, %v295
      %v371 = vpop.permute.xlu0 %370
      %374 = vset.pattern.permute.xlu0 0
      %375 = vperm.xlu0 %374, %v296
      %v376 = vpop.permute.xlu0 %375
      %379 = vset.pattern.permute.xlu0 0
      %380 = vperm.xlu0 %379, %v297
      %v381 = vpop.permute.xlu0 %380
      %384 = vset.pattern.permute.xlu0 0
      %385 = vperm.xlu0 %384, %v298
      %v386 = vpop.permute.xlu0 %385
      %389 = vset.pattern.permute.xlu0 0
      %390 = vperm.xlu0 %389, %v299
      %v391 = vpop.permute.xlu0 %390
      %394 = vset.pattern.permute.xlu0 0
      %395 = vperm.xlu0 %394, %v300
      %v396 = vpop.permute.xlu0 %395
      %399 = vset.pattern.permute.xlu0 0
      %400 = vperm.xlu0 %399, %v301
      %v401 = vpop.permute.xlu0 %400
      %404 = vset.pattern.permute.xlu0 0
      %405 = vperm.xlu0 %404, %v302
      %v406 = vpop.permute.xlu0 %405
      %409 = vset.pattern.permute.xlu0 0
      %410 = vperm.xlu0 %409, %v303
      %v411 = vpop.permute.xlu0 %410
      %414 = vset.pattern.permute.xlu0 0
      %415 = vperm.xlu0 %414, %v304
      %v416 = vpop.permute.xlu0 %415
      %419 = vset.pattern.permute.xlu0 0
      %420 = vperm.xlu0 %419, %v305
      %v421 = vpop.permute.xlu0 %420
      %424 = vset.pattern.permute.xlu0 0
      %425 = vperm.xlu0 %424, %v306
      %v426 = vpop.permute.xlu0 %425
      %429 = vset.pattern.permute.xlu0 0
      %430 = vperm.xlu0 %429, %v307
      %v431 = vpop.permute.xlu0 %430
      %434 = vset.pattern.permute.xlu0 0
      %435 = vperm.xlu0 %434, %v308
      %v436 = vpop.permute.xlu0 %435
      %439 = vset.pattern.permute.xlu0 0
      %440 = vperm.xlu0 %439, %v309
      %v441 = vpop.permute.xlu0 %440
      %444 = vset.pattern.permute.xlu0 0
      %445 = vperm.xlu0 %444, %v310
      %v446 = vpop.permute.xlu0 %445
      %449 = vset.pattern.permute.xlu0 0
      %450 = vperm.xlu0 %449, %v311
      %v451 = vpop.permute.xlu0 %450
      %454 = vset.pattern.permute.xlu0 0
      %455 = vperm.xlu0 %454, %v312
      %v456 = vpop.permute.xlu0 %455
      %459 = vset.pattern.permute.xlu0 0
      %460 = vperm.xlu0 %459, %v313
      %v461 = vpop.permute.xlu0 %460
      %464 = vset.pattern.permute.xlu0 0
      %465 = vperm.xlu0 %464, %v314
      %v466 = vpop.permute.xlu0 %465
      %469 = vset.pattern.permute.xlu0 0
      %470 = vperm.xlu0 %469, %v315
      %v471 = vpop.permute.xlu0 %470
      %474 = vset.pattern.permute.xlu0 0
      %475 = vperm.xlu0 %474, %v316
      %v476 = vpop.permute.xlu0 %475
      %479 = vset.pattern.permute.xlu0 0
      %480 = vperm.xlu0 %479, %v317
      %v481 = vpop.permute.xlu0 %480
      %484 = vset.pattern.permute.xlu0 0
      %485 = vperm.xlu0 %484, %v318
      %v486 = vpop.permute.xlu0 %485
      %489 = vset.pattern.permute.xlu0 0
      %490 = vperm.xlu0 %489, %v319
      %v491 = vpop.permute.xlu0 %490
      %vm493 = vcmask 261120
      %v495 = vsel %vm493, %v256, 0
      %v498 = vsel %vm493, %v257, 0
      %v501 = vsel %vm493, %v258, 0
      %v504 = vsel %vm493, %v259, 0
      %v507 = vsel %vm493, %v260, 0
      %v510 = vsel %vm493, %v261, 0
      %v513 = vsel %vm493, %v262, 0
      %v516 = vsel %vm493, %v263, 0
      %v519 = vsel %vm493, %v264, 0
      %v522 = vsel %vm493, %v265, 0
      %v525 = vsel %vm493, %v266, 0
      %v528 = vsel %vm493, %v267, 0
      %v531 = vsel %vm493, %v268, 0
      %v534 = vsel %vm493, %v269, 0
      %v537 = vsel %vm493, %v270, 0
      %v540 = vsel %vm493, %v271, 0
      %v543 = vsel %vm493, %v272, 0
      %v546 = vsel %vm493, %v273, 0
      %v549 = vsel %vm493, %v274, 0
      %v552 = vsel %vm493, %v275, 0
      %v555 = vsel %vm493, %v276, 0
      %v558 = vsel %vm493, %v277, 0
      %v561 = vsel %vm493, %v278, 0
      %v564 = vsel %vm493, %v279, 0
      %v567 = vsel %vm493, %v280, 0
      %v570 = vsel %vm493, %v281, 0
      %v573 = vsel %vm493, %v282, 0
      %v576 = vsel %vm493, %v283, 0
      %v579 = vsel %vm493, %v284, 0
      %v582 = vsel %vm493, %v285, 0
      %v585 = vsel %vm493, %v286, 0
      %v588 = vsel %vm493, %v287, 0
      %590 = vmatprep.subr.mxu0 0.0
      %591 = vmatpush1.msra.mxu0 %v329
      %592 = vmatprep.subr.mxu0 0.0
      %593 = vmatpush1.msra.mxu0 %v330
      %594 = vmatprep.subr.mxu0 0.0
      %595 = vmatpush1.msra.mxu0 %v331
      %596 = vmatprep.subr.mxu0 0.0
      %597 = vmatpush1.msra.mxu0 %v332
      %598 = vmatprep.subr.mxu0 0.0
      %599 = vmatpush1.msra.mxu0 0.0
      %600 = vmatprep.subr.mxu0 0.0
      %601 = vmatpush1.msra.mxu0 0.0
      %602 = vmatprep.subr.mxu0 0.0
      %603 = vmatpush1.msra.mxu0 0.0
      %604 = vmatprep.subr.mxu0 0.0
      %605 = vmatpush1.msra.mxu0 0.0
      %606 = vmatprep.subr.mxu0 0.0
      %607 = vmatpush1.msra.mxu0 0.0
      %608 = vmatprep.subr.mxu0 0.0
      %609 = vmatpush1.msra.mxu0 0.0
      %610 = vmatprep.subr.mxu0 0.0
      %611 = vmatpush1.msra.mxu0 0.0
      %612 = vmatprep.subr.mxu0 0.0
      %613 = vmatpush1.msra.mxu0 0.0
      %614 = vmatprep.subr.mxu0 0.0
      %615 = vmatpush1.msra.mxu0 0.0
      %616 = vmatprep.subr.mxu0 0.0
      %617 = vmatpush1.msra.mxu0 0.0
      %618 = vmatprep.subr.mxu0 0.0
      %619 = vmatpush1.msra.mxu0 0.0
      %620 = vmatprep.subr.mxu0 0.0
      %621 = vmatpush1.msra.mxu0 0.0
      %622 = vmatprep.subr.mxu0 0.0
      %623 = vmatpush1.msra.mxu0 0.0
      %624 = vmatprep.subr.mxu0 0.0
      %625 = vmatpush1.msra.mxu0 0.0
      %626 = vmatprep.subr.mxu0 0.0
      %627 = vmatpush1.msra.mxu0 0.0
      %628 = vmatprep.subr.mxu0 0.0
      %629 = vmatpush1.msra.mxu0 0.0
      %630 = vmatprep.subr.mxu0 0.0
      %631 = vmatpush1.msra.mxu0 0.0
      %632 = vmatprep.subr.mxu0 0.0
      %633 = vmatpush1.msra.mxu0 0.0
      %634 = vmatprep.subr.mxu0 0.0
      %635 = vmatpush1.msra.mxu0 0.0
      %636 = vmatprep.subr.mxu0 0.0
      %637 = vmatpush1.msra.mxu0 0.0
      %638 = vmatprep.subr.mxu0 0.0
      %639 = vmatpush1.msra.mxu0 0.0
      %640 = vmatprep.subr.mxu0 0.0
      %641 = vmatpush1.msra.mxu0 0.0
      %642 = vmatprep.subr.mxu0 0.0
      %643 = vmatpush1.msra.mxu0 0.0
      %644 = vmatprep.subr.mxu0 0.0
      %645 = vmatpush1.msra.mxu0 0.0
      %646 = vmatprep.subr.mxu0 0.0
      %647 = vmatpush1.msra.mxu0 0.0
      %648 = vmatprep.subr.mxu0 0.0
      %649 = vmatpush1.msra.mxu0 0.0
      %650 = vmatprep.subr.mxu0 0.0
      %651 = vmatpush1.msra.mxu0 0.0
      %652 = vmatprep.subr.mxu0 0.0
      %653 = vmatpush1.msra.mxu0 0.0
      %654 = vmatprep.mubr.f32.mxu0 0.0
      %655 = vmatmul.mubr.f32.gmra.mrb[0].mxu0 %v495
      %v656 = vpop.f32.mrb[0].mxu0
      %v657 = vadd.f32 %v336, %v656
      %v658 = vpop.f32.mrb[0].mxu0
      %659 = vmatprep.mubr.f32.mxu0 0.0
      %660 = vmatmul.mubr.f32.gmra.mrb[0].mxu0 %v498
      %v661 = vpop.f32.mrb[0].mxu0
      %v662 = vadd.f32 %v341, %v661
      %v663 = vpop.f32.mrb[0].mxu0
      %664 = vmatprep.mubr.f32.mxu0 0.0
      %665 = vmatmul.mubr.f32.gmra.mrb[0].mxu0 %v501
      %v666 = vpop.f32.mrb[0].mxu0
      %v667 = vadd.f32 %v346, %v666
      %v668 = vpop.f32.mrb[0].mxu0
      %669 = vmatprep.mubr.f32.mxu0 0.0
      %670 = vmatmul.mubr.f32.gmra.mrb[0].mxu0 %v504
      %v671 = vpop.f32.mrb[0].mxu0
      %v672 = vadd.f32 %v351, %v671
      %v673 = vpop.f32.mrb[0].mxu0
      %674 = vmatprep.mubr.f32.mxu0 0.0
      %675 = vmatmul.mubr.f32.gmra.mrb[0].mxu0 %v507
      %v676 = vpop.f32.mrb[0].mxu0
      %v677 = vadd.f32 %v356, %v676
      %v678 = vpop.f32.mrb[0].mxu0
      %679 = vmatprep.mubr.f32.mxu0 0.0
      %680 = vmatmul.mubr.f32.gmra.mrb[0].mxu0 %v510
      %v681 = vpop.f32.mrb[0].mxu0
      %v682 = vadd.f32 %v361, %v681
      %v683 = vpop.f32.mrb[0].mxu0
      %684 = vmatprep.mubr.f32.mxu0 0.0
      %685 = vmatmul.mubr.f32.gmra.mrb[0].mxu0 %v513
      %v686 = vpop.f32.mrb[0].mxu0
      %v687 = vadd.f32 %v366, %v686
      %v688 = vpop.f32.mrb[0].mxu0
      %689 = vmatprep.mubr.f32.mxu0 0.0
      %690 = vmatmul.mubr.f32.gmra.mrb[0].mxu0 %v516
      %v691 = vpop.f32.mrb[0].mxu0
      %v692 = vadd.f32 %v371, %v691
      %v693 = vpop.f32.mrb[0].mxu0
      %694 = vmatprep.mubr.f32.mxu0 0.0
      %695 = vmatmul.mubr.f32.gmra.mrb[0].mxu0 %v519
      %v696 = vpop.f32.mrb[0].mxu0
      %v697 = vadd.f32 %v376, %v696
      %v698 = vpop.f32.mrb[0].mxu0
      %699 = vmatprep.mubr.f32.mxu0 0.0
      %700 = vmatmul.mubr.f32.gmra.mrb[0].mxu0 %v522
      %v701 = vpop.f32.mrb[0].mxu0
      %v702 = vadd.f32 %v381, %v701
      %v703 = vpop.f32.mrb[0].mxu0
      %704 = vmatprep.mubr.f32.mxu0 0.0
      %705 = vmatmul.mubr.f32.gmra.mrb[0].mxu0 %v525
      %v706 = vpop.f32.mrb[0].mxu0
      %v707 = vadd.f32 %v386, %v706
      %v708 = vpop.f32.mrb[0].mxu0
      %709 = vmatprep.mubr.f32.mxu0 0.0
      %710 = vmatmul.mubr.f32.gmra.mrb[0].mxu0 %v528
      %v711 = vpop.f32.mrb[0].mxu0
      %v712 = vadd.f32 %v391, %v711
      %v713 = vpop.f32.mrb[0].mxu0
      %714 = vmatprep.mubr.f32.mxu0 0.0
      %715 = vmatmul.mubr.f32.gmra.mrb[0].mxu0 %v531
      %v716 = vpop.f32.mrb[0].mxu0
      %v717 = vadd.f32 %v396, %v716
      %v718 = vpop.f32.mrb[0].mxu0
      %719 = vmatprep.mubr.f32.mxu0 0.0
      %720 = vmatmul.mubr.f32.gmra.mrb[0].mxu0 %v534
      %v721 = vpop.f32.mrb[0].mxu0
      %v722 = vadd.f32 %v401, %v721
      %v723 = vpop.f32.mrb[0].mxu0
      %724 = vmatprep.mubr.f32.mxu0 0.0
      %725 = vmatmul.mubr.f32.gmra.mrb[0].mxu0 %v537
      %v726 = vpop.f32.mrb[0].mxu0
      %v727 = vadd.f32 %v406, %v726
      %v728 = vpop.f32.mrb[0].mxu0
      %729 = vmatprep.mubr.f32.mxu0 0.0
      %730 = vmatmul.mubr.f32.gmra.mrb[0].mxu0 %v540
      %v731 = vpop.f32.mrb[0].mxu0
      %v732 = vadd.f32 %v411, %v731
      %v733 = vpop.f32.mrb[0].mxu0
      %734 = vmatprep.mubr.f32.mxu0 0.0
      %735 = vmatmul.mubr.f32.gmra.mrb[0].mxu0 %v543
      %v736 = vpop.f32.mrb[0].mxu0
      %v737 = vadd.f32 %v416, %v736
      %v738 = vpop.f32.mrb[0].mxu0
      %739 = vmatprep.mubr.f32.mxu0 0.0
      %740 = vmatmul.mubr.f32.gmra.mrb[0].mxu0 %v546
      %v741 = vpop.f32.mrb[0].mxu0
      %v742 = vadd.f32 %v421, %v741
      %v743 = vpop.f32.mrb[0].mxu0
      %744 = vmatprep.mubr.f32.mxu0 0.0
      %745 = vmatmul.mubr.f32.gmra.mrb[0].mxu0 %v549
      %v746 = vpop.f32.mrb[0].mxu0
      %v747 = vadd.f32 %v426, %v746
      %v748 = vpop.f32.mrb[0].mxu0
      %749 = vmatprep.mubr.f32.mxu0 0.0
      %750 = vmatmul.mubr.f32.gmra.mrb[0].mxu0 %v552
      %v751 = vpop.f32.mrb[0].mxu0
      %v752 = vadd.f32 %v431, %v751
      %v753 = vpop.f32.mrb[0].mxu0
      %754 = vmatprep.mubr.f32.mxu0 0.0
      %755 = vmatmul.mubr.f32.gmra.mrb[0].mxu0 %v555
      %v756 = vpop.f32.mrb[0].mxu0
      %v757 = vadd.f32 %v436, %v756
      %v758 = vpop.f32.mrb[0].mxu0
      %759 = vmatprep.mubr.f32.mxu0 0.0
      %760 = vmatmul.mubr.f32.gmra.mrb[0].mxu0 %v558
      %v761 = vpop.f32.mrb[0].mxu0
      %v762 = vadd.f32 %v441, %v761
      %v763 = vpop.f32.mrb[0].mxu0
      %764 = vmatprep.mubr.f32.mxu0 0.0
      %765 = vmatmul.mubr.f32.gmra.mrb[0].mxu0 %v561
      %v766 = vpop.f32.mrb[0].mxu0
      %v767 = vadd.f32 %v446, %v766
      %v768 = vpop.f32.mrb[0].mxu0
      %769 = vmatprep.mubr.f32.mxu0 0.0
      %770 = vmatmul.mubr.f32.gmra.mrb[0].mxu0 %v564
      %v771 = vpop.f32.mrb[0].mxu0
      %v772 = vadd.f32 %v451, %v771
      %v773 = vpop.f32.mrb[0].mxu0
      %774 = vmatprep.mubr.f32.mxu0 0.0
      %775 = vmatmul.mubr.f32.gmra.mrb[0].mxu0 %v567
      %v776 = vpop.f32.mrb[0].mxu0
      %v777 = vadd.f32 %v456, %v776
      %v778 = vpop.f32.mrb[0].mxu0
      %779 = vmatprep.mubr.f32.mxu0 0.0
      %780 = vmatmul.mubr.f32.gmra.mrb[0].mxu0 %v570
      %v781 = vpop.f32.mrb[0].mxu0
      %v782 = vadd.f32 %v461, %v781
      %v783 = vpop.f32.mrb[0].mxu0
      %784 = vmatprep.mubr.f32.mxu0 0.0
      %785 = vmatmul.mubr.f32.gmra.mrb[0].mxu0 %v573
      %v786 = vpop.f32.mrb[0].mxu0
      %v787 = vadd.f32 %v466, %v786
      %v788 = vpop.f32.mrb[0].mxu0
      %789 = vmatprep.mubr.f32.mxu0 0.0
      %790 = vmatmul.mubr.f32.gmra.mrb[0].mxu0 %v576
      %v791 = vpop.f32.mrb[0].mxu0
      %v792 = vadd.f32 %v471, %v791
      %v793 = vpop.f32.mrb[0].mxu0
      %794 = vmatprep.mubr.f32.mxu0 0.0
      %795 = vmatmul.mubr.f32.gmra.mrb[0].mxu0 %v579
      %v796 = vpop.f32.mrb[0].mxu0
      %v797 = vadd.f32 %v476, %v796
      %v798 = vpop.f32.mrb[0].mxu0
      %799 = vmatprep.mubr.f32.mxu0 0.0
      %800 = vmatmul.mubr.f32.gmra.mrb[0].mxu0 %v582
      %v801 = vpop.f32.mrb[0].mxu0
      %v802 = vadd.f32 %v481, %v801
      %v803 = vpop.f32.mrb[0].mxu0
      %804 = vmatprep.mubr.f32.mxu0 0.0
      %805 = vmatmul.mubr.f32.gmra.mrb[0].mxu0 %v585
      %v806 = vpop.f32.mrb[0].mxu0
      %v807 = vadd.f32 %v486, %v806
      %v808 = vpop.f32.mrb[0].mxu0
      %809 = vmatprep.mubr.f32.mxu0 0.0
      %810 = vmatmul.mubr.f32.gmra.mrb[0].mxu0 %v588
      %v811 = vpop.f32.mrb[0].mxu0
      %v812 = vadd.f32 %v491, %v811
      %v813 = vpop.f32.mrb[0].mxu0
      %814 = vdwg.mxu0
      %v815 = vmax.f32 %v657, 0.0
      %v816 = vmax.f32 %v662, 0.0
      %v817 = vmax.f32 %v667, 0.0
      %v818 = vmax.f32 %v672, 0.0
      %v819 = vmax.f32 %v677, 0.0
      %v820 = vmax.f32 %v682, 0.0
      %v821 = vmax.f32 %v687, 0.0
      %v822 = vmax.f32 %v692, 0.0
      %v823 = vmax.f32 %v697, 0.0
      %v824 = vmax.f32 %v702, 0.0
      %v825 = vmax.f32 %v707, 0.0
      %v826 = vmax.f32 %v712, 0.0
      %v827 = vmax.f32 %v717, 0.0
      %v828 = vmax.f32 %v722, 0.0
      %v829 = vmax.f32 %v727, 0.0
      %v830 = vmax.f32 %v732, 0.0
      %v831 = vmax.f32 %v737, 0.0
      %v832 = vmax.f32 %v742, 0.0
      %v833 = vmax.f32 %v747, 0.0
      %v834 = vmax.f32 %v752, 0.0
      %v835 = vmax.f32 %v757, 0.0
      %v836 = vmax.f32 %v762, 0.0
      %v837 = vmax.f32 %v767, 0.0
      %v838 = vmax.f32 %v772, 0.0
      %v839 = vmax.f32 %v777, 0.0
      %v840 = vmax.f32 %v782, 0.0
      %v841 = vmax.f32 %v787, 0.0
      %v842 = vmax.f32 %v792, 0.0
      %v843 = vmax.f32 %v797, 0.0
      %v844 = vmax.f32 %v802, 0.0
      %v845 = vmax.f32 %v807, 0.0
      %v846 = vmax.f32 %v812, 0.0
      %848 = vset.pattern.permute.xlu0 0
      %849 = vperm.xlu0 %848, %v326
      %v850 = vpop.permute.xlu0 %849
      %853 = vset.pattern.permute.xlu0 0
      %854 = vperm.xlu0 %853, %v327
      %v855 = vpop.permute.xlu0 %854
      %858 = vset.pattern.permute.xlu0 0
      %859 = vperm.xlu0 %858, %v328
      %v860 = vpop.permute.xlu0 %859
      %862 = vmatprep.subr.mxu0 0.0
      %863 = vmatpush1.msra.mxu0 %v815
      %864 = vmatprep.subr.mxu0 0.0
      %865 = vmatpush1.msra.mxu0 %v816
      %866 = vmatprep.subr.mxu0 0.0
      %867 = vmatpush1.msra.mxu0 %v817
      %868 = vmatprep.subr.mxu0 0.0
      %869 = vmatpush1.msra.mxu0 %v818
      %870 = vmatprep.subr.mxu0 0.0
      %871 = vmatpush1.msra.mxu0 %v819
      %872 = vmatprep.subr.mxu0 0.0
      %873 = vmatpush1.msra.mxu0 %v820
      %874 = vmatprep.subr.mxu0 0.0
      %875 = vmatpush1.msra.mxu0 %v821
      %876 = vmatprep.subr.mxu0 0.0
      %877 = vmatpush1.msra.mxu0 %v822
      %878 = vmatprep.subr.mxu0 0.0
      %879 = vmatpush1.msra.mxu0 %v823
      %880 = vmatprep.subr.mxu0 0.0
      %881 = vmatpush1.msra.mxu0 %v824
      %882 = vmatprep.subr.mxu0 0.0
      %883 = vmatpush1.msra.mxu0 %v825
      %884 = vmatprep.subr.mxu0 0.0
      %885 = vmatpush1.msra.mxu0 %v826
      %886 = vmatprep.subr.mxu0 0.0
      %887 = vmatpush1.msra.mxu0 %v827
      %888 = vmatprep.subr.mxu0 0.0
      %889 = vmatpush1.msra.mxu0 %v828
      %890 = vmatprep.subr.mxu0 0.0
      %891 = vmatpush1.msra.mxu0 %v829
      %892 = vmatprep.subr.mxu0 0.0
      %893 = vmatpush1.msra.mxu0 %v830
      %894 = vmatprep.subr.mxu0 0.0
      %895 = vmatpush1.msra.mxu0 %v831
      %896 = vmatprep.subr.mxu0 0.0
      %897 = vmatpush1.msra.mxu0 %v832
      %898 = vmatprep.subr.mxu0 0.0
      %899 = vmatpush1.msra.mxu0 %v833
      %900 = vmatprep.subr.mxu0 0.0
      %901 = vmatpush1.msra.mxu0 %v834
      %902 = vmatprep.subr.mxu0 0.0
      %903 = vmatpush1.msra.mxu0 %v835
      %904 = vmatprep.subr.mxu0 0.0
      %905 = vmatpush1.msra.mxu0 %v836
      %906 = vmatprep.subr.mxu0 0.0
      %907 = vmatpush1.msra.mxu0 %v837
      %908 = vmatprep.subr.mxu0 0.0
      %909 = vmatpush1.msra.mxu0 %v838
      %910 = vmatprep.subr.mxu0 0.0
      %911 = vmatpush1.msra.mxu0 %v839
      %912 = vmatprep.subr.mxu0 0.0
      %913 = vmatpush1.msra.mxu0 %v840
      %914 = vmatprep.subr.mxu0 0.0
      %915 = vmatpush1.msra.mxu0 %v841
      %916 = vmatprep.subr.mxu0 0.0
      %917 = vmatpush1.msra.mxu0 %v842
      %918 = vmatprep.subr.mxu0 0.0
      %919 = vmatpush1.msra.mxu0 %v843
      %920 = vmatprep.subr.mxu0 0.0
      %921 = vmatpush1.msra.mxu0 %v844
      %922 = vmatprep.subr.mxu0 0.0
      %923 = vmatpush1.msra.mxu0 %v845
      %924 = vmatprep.subr.mxu0 0.0
      %925 = vmatpush1.msra.mxu0 %v846
      %926 = vmatprep.mubr.f32.mxu0 %v321
      %927 = vmatmul.mubr.f32.gmra.mrb[0].mxu0 %v320
      %v928 = vpop.f32.mrb[0].mxu0
      %v929 = vadd.f32 %v850, %v928
      %v930 = vpop.f32.mrb[0].mxu0
      %931 = vmatprep.mubr.f32.mxu0 %v323
      %932 = vmatmul.mubr.f32.gmra.mrb[0].mxu0 %v322
      %v933 = vpop.f32.mrb[0].mxu0
      %v934 = vadd.f32 %v855, %v933
      %v935 = vpop.f32.mrb[0].mxu0
      %936 = vmatprep.mubr.f32.mxu0 %v325
      %937 = vmatmul.mubr.f32.gmra.mrb[0].mxu0 %v324
      %v938 = vpop.f32.mrb[0].mxu0
      %v939 = vadd.f32 %v860, %v938
      %v940 = vpop.f32.mrb[0].mxu0
      %941 = vdwg.mxu0
      %v942 = vadd.f32 %v929, %v329
      %v943 = vadd.f32 %v934, %v330
      %v944 = vadd.f32 %v939, %v331
      %945 = vst [vmem:[%s255] sm:$0xff] %v942
      %946 = vst [vmem:[%s255 + $0x8] sm:$0xff] %v943
      %947 = vst [vmem:[%s255 + $0x10] sm:$0xff] %v944
      %p948 = scmp.lt.s32.totalorder %s20, 1
      %s949 = scalar_select %p948, %s20, 1
      %p950 = scmp.lt.s32.totalorder %s21, 0
      %s951 = scalar_select %p950, %s21, 0
      %s952 = smul.addr %s949, 3
      %s953 = sadd.s32 %s951, %s952
      %s954 = smul.addr %s953, 8
      %s955 = scalar_lea.vmem %s5, %s954
      // Predicated region
      $region41: #{ef_forward.1} parent=39 // pred_check
        %p956 = pneg %p160
      $region42: #{ef_forward.1} parent=39 // pred_check_branch
        %958 = sbr.rel (%p956) target = $region44
      $region43: #{ef_forward.1} parent=39 // pred_region
        _
      $region44: #{ef_forward.1} parent=39 // pred_fallthru
        _
    $region40: #{ef_forward.1} parent=5 // pred_fallthru
      _
    %p959 = scmp.le.s32.totalorder 2, %s11
    // Predicated region
    $region45: #{ef_forward.1} parent=5 // pred_check
      %p960 = pneg %p959
    $region46: #{ef_forward.1} parent=5 // pred_check_branch
      %962 = sbr.rel (%p960) target = $region48
    $region47: #{ef_forward.1} parent=5 // pred_region
      %s963 = ssub.s32 %s11, 2
      // Predicated region
      $region49: #{ef_forward.1} parent=47 // pred_check
        %p964 = pneg %p166
      $region50: #{ef_forward.1} parent=47 // pred_check_branch
        %966 = sbr.rel (%p964) target = $region52
      $region51: #{ef_forward.1} parent=47 // pred_region
        %p967 = scmp.lt.s32.totalorder %s22, 1
        %s968 = scalar_select %p967, %s22, 1
        %p969 = scmp.lt.s32.totalorder %s23, 0
        %s970 = scalar_select %p969, %s23, 0
        %s971 = smul.addr %s968, 3
        %s972 = sadd.s32 %s970, %s971
        %s973 = smul.addr %s972, 8
        %s974 = scalar_lea.vmem %s5, %s973
      $region52: #{ef_forward.1} parent=47 // pred_fallthru
        _
    $region48: #{ef_forward.1} parent=5 // pred_fallthru
      _
  $region6: #{ef_forward.1} parent=0 // loop_footer
    %s15 = sadd.s32 1, %s11
  $region7: #{ef_forward.1} parent=0 // loop_footer_branch
    %10 = sbr.rel target = $region3
  $region8: #{ef_forward.1} parent=0 // loop_exit
    _

</llo_original>
